<compile_context>
chip_gen: v6e
topology: v6e:2x2x1
jax: 0.10.0
libtpu: 0.0.40
codegen_flags: <defaults>
</compile_context>

<pallas_src>
import jax
import jax.numpy as jnp
from jax.experimental import pallas as pl
from jax.experimental.pallas import tpu as pltpu

# ---------------- problem sizes (small, consistent with the module) ----------
B = 2          # batch
T = 8          # task_gen.seq_len (task_dim)
C, H, W = 4, 16, 16
D_IN = C * H * W       # 1024, flattened frame
H_ENC = 256            # encoder hidden
Z = 128                # self.z_size
NHID = 32              # args.nhid
Y_DIM = 4              # task_gen.y_dim
MATRIX_SIZE = T * T    # reduced=False, no_adding=False
EPS = 1e-8
NEG_BIG = -1e30        # large finite negative instead of -inf (robust mask)
OUT_LANES = 128        # lane-dense output slab width (>= T)


def corelnet_kernel(x_ref, w1_ref, w2_ref, vecs_ref, out_ref):
    # One grid step == one batch element (its T frames).
    # ---- shape encoder (MLP): (T, D_IN) -> (T, Z), bf16 MXU / f32 acc -------
    x = x_ref[0]                                       # (T, D_IN) bf16
    h = jnp.dot(x, w1_ref[...], preferred_element_type=jnp.float32)
    h = jnp.maximum(h + vecs_ref[0:1, :], 0.0)         # b1 (1, 256)
    s = jnp.dot(h.astype(jnp.bfloat16), w2_ref[...],
                preferred_element_type=jnp.float32)
    s = s + vecs_ref[1:2, 0:Z]                         # b2 (1, 128)

    # ---- context norm over time axis (torch.var default: unbiased) ----------
    mu = jnp.mean(s, axis=0, keepdims=True)
    var = jnp.sum((s - mu) ** 2, axis=0, keepdims=True) / (T - 1.0)
    inv_sigma = jax.lax.rsqrt(var + EPS)               # EUP rsqrt
    gamma = vecs_ref[2:3, 0:Z]
    beta = vecs_ref[3:4, 0:Z]
    s = (s - mu) * inv_sigma * gamma + beta            # (T, Z) f32

    # ---- relation matrix (T, T), f32 for accuracy ----------------------------
    R = jax.lax.dot_general(s, s, (((1,), (1,)), ((), ())),
                            preferred_element_type=jnp.float32)

    # lower-triangle (incl. diag) masked softmax over columns
    row = jax.lax.broadcasted_iota(jnp.int32, (T, T), 0)
    col = jax.lax.broadcasted_iota(jnp.int32, (T, T), 1)
    allowed = col <= row
    Rm = jnp.where(allowed, R, NEG_BIG)
    m = jnp.max(Rm, axis=1, keepdims=True)
    e = jnp.where(allowed, jnp.exp(Rm - m), 0.0)
    p = e / jnp.sum(e, axis=1, keepdims=True)          # exact division (review)

    # ---- R = R + R.tril(-1).T  ==  p + (p.T with diagonal zeroed) ------------
    Rsym = p + jnp.where(row == col, 0.0, p.T)

    # ---- single lane-dense padded slab, one unmasked full store --------------
    out_ref[...] = jnp.pad(Rsym, ((0, 0), (0, OUT_LANES - T)))


def corelnet_forward(x_seq, params):
    """x_seq: (B, T, C, H, W) float32 NCHW frames."""
    # MXU operands in bf16 (halves the dominant HBM bytes: w1 is 1 MiB f32).
    x_bf16 = x_seq.reshape(B, T, D_IN).astype(jnp.bfloat16)
    w1_bf16 = params["w1"].astype(jnp.bfloat16)
    w2_bf16 = params["w2"].astype(jnp.bfloat16)

    # Pack the small f32 params into one slab -> 4 input DMAs total.
    vecs = jnp.zeros((8, H_ENC), jnp.float32)
    vecs = vecs.at[0, :H_ENC].set(params["b1"].reshape(-1))
    vecs = vecs.at[1, :Z].set(params["b2"].reshape(-1))
    vecs = vecs.at[2, :Z].set(params["gamma"].reshape(-1))
    vecs = vecs.at[3, :Z].set(params["beta"].reshape(-1))

    flops = 2 * (B * T * D_IN * H_ENC + B * T * H_ENC * Z + B * T * T * Z)
    bytes_accessed = (x_bf16.size * 2 + w1_bf16.size * 2 + w2_bf16.size * 2
                      + vecs.size * 4 + B * T * OUT_LANES * 4)

    slab = pl.pallas_call(
        corelnet_kernel,
        out_shape=jax.ShapeDtypeStruct((B * T, OUT_LANES), jnp.float32),
        grid=(B,),
        in_specs=[
            # x: per-batch (T, D_IN) block; last two block dims == full dims.
            pl.BlockSpec((1, T, D_IN), lambda b: (b, 0, 0)),
            # weights / vecs: constant block index -> DMA'd once across grid.
            pl.BlockSpec((D_IN, H_ENC), lambda b: (0, 0)),
            pl.BlockSpec((H_ENC, Z), lambda b: (0, 0)),
            pl.BlockSpec((8, H_ENC), lambda b: (0, 0)),
        ],
        out_specs=pl.BlockSpec((T, OUT_LANES), lambda b: (b, 0)),
        compiler_params=pltpu.CompilerParams(
            dimension_semantics=("parallel",)),
        cost_estimate=pl.CostEstimate(
            flops=flops, transcendentals=512, bytes_accessed=bytes_accessed),
    )(x_bf16, w1_bf16, w2_bf16, vecs)

    # ---- glue + tiny final head in the wrapper (XLA fuses; review item 2) ----
    r_save = slab.reshape(B, T, OUT_LANES)[:, :, :T]        # (B, T, T)
    r_flat = r_save.reshape(B, MATRIX_SIZE)                 # (B, 64)
    hf = jnp.maximum(r_flat @ params["wf1"] + params["bf1"], 0.0)
    y_lin = hf @ params["wf2"] + params["bf2"]              # (B, Y_DIM)
    y_pred = jnp.argmax(y_lin, axis=1)
    return y_lin, y_pred, r_save


def init_params(key):
    ks = jax.random.split(key, 8)

    def lin(kw, fan_in, fan_out):
        bound = 1.0 / jnp.sqrt(fan_in)
        return jax.random.uniform(kw, (fan_in, fan_out), jnp.float32, -bound, bound)

    return {
        # shape encoder (MLP)
        "w1": lin(ks[0], D_IN, H_ENC),
        "b1": jax.random.uniform(ks[1], (1, H_ENC), jnp.float32, -0.03, 0.03),
        "w2": lin(ks[2], H_ENC, Z),
        "b2": jax.random.uniform(ks[3], (1, Z), jnp.float32, -0.06, 0.06),
        # context norm parameters (nn.Parameter(ones/zeros))
        "gamma": jnp.ones((1, 1, Z), jnp.float32),
        "beta": jnp.zeros((1, 1, Z), jnp.float32),
        # final head
        "wf1": lin(ks[4], MATRIX_SIZE, NHID),
        "bf1": jax.random.uniform(ks[5], (1, NHID), jnp.float32, -0.125, 0.125),
        "wf2": lin(ks[6], NHID, Y_DIM),
        "bf2": jax.random.uniform(ks[7], (1, Y_DIM), jnp.float32, -0.17, 0.17),
    }


if __name__ == "__main__":
    key = jax.random.PRNGKey(0)
    k_x, k_p = jax.random.split(key)

    x_seq = jax.random.normal(k_x, (B, T, C, H, W), dtype=jnp.float32)
    params = init_params(k_p)

    y_lin, y_pred, r_save = jax.jit(corelnet_forward)(x_seq, params)
    jax.block_until_ready((y_lin, y_pred, r_save))

    assert y_lin.shape == (B, Y_DIM)
    assert y_pred.shape == (B,)
    assert r_save.shape == (B, T, T)
    assert bool(jnp.all(jnp.isfinite(y_lin)))
    assert bool(jnp.all(jnp.isfinite(r_save)))
    # masked-softmax row 0 of each batch is [1, 0, ..., 0] before symmetrization
    assert bool(jnp.all(jnp.abs(r_save[:, 0, 0] - 1.0) < 1e-2))
    # strictly-upper entries equal the mirrored lower entries after symmetrize
    assert bool(jnp.all(jnp.abs(r_save[:, 0, 1] - r_save[:, 1, 0]) < 1e-5))
    print("KERNEL_OK")
</pallas_src>

<mosaic_0001>
module attributes {stable_mosaic.version = 11 : i64} {
  func.func @corelnet_kernel(%arg0: i32, %arg1: memref<1x8x1024xbf16, #tpu.memory_space<vmem>>, %arg2: memref<1024x256xbf16, #tpu.memory_space<vmem>>, %arg3: memref<256x128xbf16, #tpu.memory_space<vmem>>, %arg4: memref<8x256xf32, #tpu.memory_space<vmem>>, %arg5: memref<8x128xf32, #tpu.memory_space<vmem>>) attributes {dimension_semantics = [#tpu.dimension_semantics<parallel>], iteration_bounds = array<i64: 2>, scalar_prefetch = 0 : i64, scratch_operands = 0 : i64, tpu.core_type = #tpu.core_type<tc>, window_params = [{transform_indices = @transform_0, window_bounds = array<i64: 1, 8, 1024>}, {pipeline_mode = #tpu.pipeline_mode<synchronous>, transform_indices = @transform_1, window_bounds = array<i64: 1024, 256>}, {pipeline_mode = #tpu.pipeline_mode<synchronous>, transform_indices = @transform_2, window_bounds = array<i64: 256, 128>}, {pipeline_mode = #tpu.pipeline_mode<synchronous>, transform_indices = @transform_3, window_bounds = array<i64: 8, 256>}, {transform_indices = @transform_4, window_bounds = array<i64: 8, 128>}]} {
    %c0 = arith.constant 0 : index
    %c0_0 = arith.constant 0 : index
    %c0_1 = arith.constant 0 : index
    %0 = vector.load %arg1[%c0, %c0_0, %c0_1] : memref<1x8x1024xbf16, #tpu.memory_space<vmem>>, vector<1x8x1024xbf16>
    %1 = vector.shape_cast %0 : vector<1x8x1024xbf16> to vector<8x1024xbf16>
    %c0_2 = arith.constant 0 : index
    %c0_3 = arith.constant 0 : index
    %2 = vector.load %arg2[%c0_2, %c0_3] : memref<1024x256xbf16, #tpu.memory_space<vmem>>, vector<1024x256xbf16>
    %cst = arith.constant dense<0.000000e+00> : vector<8x256xf32>
    %3 = tpu.matmul %1, %2, %cst {dimension_numbers = #tpu.dot_dimension_numbers<[1], [0], [0], [1], [0, 0, 1, 1], [], []>} : vector<8x1024xbf16>, vector<1024x256xbf16>, vector<8x256xf32> -> vector<8x256xf32>
    %c0_4 = arith.constant 0 : index
    %c0_5 = arith.constant 0 : index
    %4 = vector.load %arg4[%c0_4, %c0_5] : memref<8x256xf32, #tpu.memory_space<vmem>>, vector<1x256xf32>
    %5 = vector.broadcast %4 : vector<1x256xf32> to vector<8x256xf32>
    %6 = arith.addf %3, %5 : vector<8x256xf32>
    %cst_6 = arith.constant 0.000000e+00 : f32
    %7 = vector.broadcast %cst_6 : f32 to vector<8x256xf32>
    %8 = arith.maximumf %6, %7 : vector<8x256xf32>
    %9 = arith.truncf %8 : vector<8x256xf32> to vector<8x256xbf16>
    %c0_7 = arith.constant 0 : index
    %c0_8 = arith.constant 0 : index
    %10 = vector.load %arg3[%c0_7, %c0_8] : memref<256x128xbf16, #tpu.memory_space<vmem>>, vector<256x128xbf16>
    %cst_9 = arith.constant dense<0.000000e+00> : vector<8x128xf32>
    %11 = tpu.matmul %9, %10, %cst_9 {dimension_numbers = #tpu.dot_dimension_numbers<[1], [0], [0], [1], [0, 0, 1, 1], [], []>} : vector<8x256xbf16>, vector<256x128xbf16>, vector<8x128xf32> -> vector<8x128xf32>
    %c1 = arith.constant 1 : index
    %c0_10 = arith.constant 0 : index
    %12 = vector.load %arg4[%c1, %c0_10] : memref<8x256xf32, #tpu.memory_space<vmem>>, vector<1x128xf32>
    %13 = vector.broadcast %12 : vector<1x128xf32> to vector<8x128xf32>
    %14 = arith.addf %11, %13 : vector<8x128xf32>
    %cst_11 = arith.constant dense<0.000000e+00> : vector<128xf32>
    %15 = vector.multi_reduction <add>, %14, %cst_11 [0] : vector<8x128xf32> to vector<128xf32>
    %16 = vector.shape_cast %15 : vector<128xf32> to vector<1x128xf32>
    %cst_12 = arith.constant 8.000000e+00 : f32
    %17 = vector.broadcast %cst_12 : f32 to vector<1x128xf32>
    %18 = arith.divf %16, %17 : vector<1x128xf32>
    %19 = vector.broadcast %18 : vector<1x128xf32> to vector<8x128xf32>
    %20 = arith.subf %14, %19 : vector<8x128xf32>
    %21 = arith.mulf %20, %20 : vector<8x128xf32>
    %cst_13 = arith.constant dense<0.000000e+00> : vector<128xf32>
    %22 = vector.multi_reduction <add>, %21, %cst_13 [0] : vector<8x128xf32> to vector<128xf32>
    %23 = vector.shape_cast %22 : vector<128xf32> to vector<1x128xf32>
    %cst_14 = arith.constant 7.000000e+00 : f32
    %24 = vector.broadcast %cst_14 : f32 to vector<1x128xf32>
    %25 = arith.divf %23, %24 : vector<1x128xf32>
    %cst_15 = arith.constant 9.99999993E-9 : f32
    %26 = vector.broadcast %cst_15 : f32 to vector<1x128xf32>
    %27 = arith.addf %25, %26 : vector<1x128xf32>
    %28 = math.rsqrt %27 : vector<1x128xf32>
    %c2 = arith.constant 2 : index
    %c0_16 = arith.constant 0 : index
    %29 = vector.load %arg4[%c2, %c0_16] : memref<8x256xf32, #tpu.memory_space<vmem>>, vector<1x128xf32>
    %c3 = arith.constant 3 : index
    %c0_17 = arith.constant 0 : index
    %30 = vector.load %arg4[%c3, %c0_17] : memref<8x256xf32, #tpu.memory_space<vmem>>, vector<1x128xf32>
    %31 = vector.broadcast %18 : vector<1x128xf32> to vector<8x128xf32>
    %32 = arith.subf %14, %31 : vector<8x128xf32>
    %33 = vector.broadcast %28 : vector<1x128xf32> to vector<8x128xf32>
    %34 = arith.mulf %32, %33 : vector<8x128xf32>
    %35 = vector.broadcast %29 : vector<1x128xf32> to vector<8x128xf32>
    %36 = arith.mulf %34, %35 : vector<8x128xf32>
    %37 = vector.broadcast %30 : vector<1x128xf32> to vector<8x128xf32>
    %38 = arith.addf %36, %37 : vector<8x128xf32>
    %cst_18 = arith.constant dense<0.000000e+00> : vector<8x8xf32>
    %39 = tpu.matmul %38, %38, %cst_18 {dimension_numbers = #tpu.dot_dimension_numbers<[1], [1], [0], [0], [0, 0, 1, 0], [], []>} : vector<8x128xf32>, vector<8x128xf32>, vector<8x8xf32> -> vector<8x8xf32>
    %40 = tpu.iota {dimensions = array<i32: 0>} : vector<8x8xi32>
    %41 = tpu.iota {dimensions = array<i32: 1>} : vector<8x8xi32>
    %42 = arith.cmpi sle, %41, %40 : vector<8x8xi32>
    %cst_19 = arith.constant -1.000000e+30 : f32
    %43 = vector.broadcast %cst_19 : f32 to vector<8x8xf32>
    %44 = arith.select %42, %39, %43 : vector<8x8xi1>, vector<8x8xf32>
    %cst_20 = arith.constant dense<0xFF800000> : vector<8xf32>
    %45 = vector.multi_reduction <maximumf>, %44, %cst_20 [1] : vector<8x8xf32> to vector<8xf32>
    %46 = vector.shape_cast %45 : vector<8xf32> to vector<8x1xf32>
    %47 = vector.broadcast %46 : vector<8x1xf32> to vector<8x8xf32>
    %48 = arith.subf %44, %47 : vector<8x8xf32>
    %49 = math.exp %48 : vector<8x8xf32>
    %cst_21 = arith.constant 0.000000e+00 : f32
    %50 = vector.broadcast %cst_21 : f32 to vector<8x8xf32>
    %51 = arith.select %42, %49, %50 : vector<8x8xi1>, vector<8x8xf32>
    %cst_22 = arith.constant dense<0.000000e+00> : vector<8xf32>
    %52 = vector.multi_reduction <add>, %51, %cst_22 [1] : vector<8x8xf32> to vector<8xf32>
    %53 = vector.shape_cast %52 : vector<8xf32> to vector<8x1xf32>
    %54 = vector.broadcast %53 : vector<8x1xf32> to vector<8x8xf32>
    %55 = arith.divf %51, %54 : vector<8x8xf32>
    %56 = arith.cmpi eq, %40, %41 : vector<8x8xi32>
    %57 = tpu.transpose %55, [1, 0] : vector<8x8xf32> -> vector<8x8xf32>
    %cst_23 = arith.constant 0.000000e+00 : f32
    %58 = vector.broadcast %cst_23 : f32 to vector<8x8xf32>
    %59 = arith.select %56, %58, %57 : vector<8x8xi1>, vector<8x8xf32>
    %60 = arith.addf %55, %59 : vector<8x8xf32>
    %c0_i32 = arith.constant 0 : i32
    %61 = arith.sitofp %c0_i32 : i32 to f32
    %62 = vector.broadcast %61 : f32 to vector<8x120xf32>
    %63 = tpu.concatenate %60, %62 in 1 : vector<8x8xf32>, vector<8x120xf32> -> vector<8x128xf32>
    %c0_24 = arith.constant 0 : index
    %c0_25 = arith.constant 0 : index
    %64 = vector.load %arg5[%c0_24, %c0_25] : memref<8x128xf32, #tpu.memory_space<vmem>>, vector<8x128xf32>
    tpu.vector_store %arg5[%c0_24, %c0_25], %63 {strides = array<i32>} : memref<8x128xf32, #tpu.memory_space<vmem>>, vector<8x128xf32>,
    return
  }
  func.func @transform_0(%arg0: i32) -> (i32, i32, i32) {
    %c0_i32 = arith.constant 0 : i32
    %c0_i32_0 = arith.constant 0 : i32
    %c0_i32_1 = arith.constant 0 : i32
    return %arg0, %c0_i32, %c0_i32_0 : i32, i32, i32
  }
  func.func @transform_1(%arg0: i32) -> (i32, i32) {
    %c0_i32 = arith.constant 0 : i32
    %c0_i32_0 = arith.constant 0 : i32
    %c0_i32_1 = arith.constant 0 : i32
    return %c0_i32, %c0_i32_0 : i32, i32
  }
  func.func @transform_2(%arg0: i32) -> (i32, i32) {
    %c0_i32 = arith.constant 0 : i32
    %c0_i32_0 = arith.constant 0 : i32
    %c0_i32_1 = arith.constant 0 : i32
    return %c0_i32, %c0_i32_0 : i32, i32
  }
  func.func @transform_3(%arg0: i32) -> (i32, i32) {
    %c0_i32 = arith.constant 0 : i32
    %c0_i32_0 = arith.constant 0 : i32
    %c0_i32_1 = arith.constant 0 : i32
    return %c0_i32, %c0_i32_0 : i32, i32
  }
  func.func @transform_4(%arg0: i32) -> (i32, i32) {
    %c0_i32 = arith.constant 0 : i32
    %c0_i32_0 = arith.constant 0 : i32
    return %arg0, %c0_i32 : i32, i32
  }
}

</mosaic_0001>

<llo_original>
// kernel: corelnet_forward.1
$region0: #{corelnet_forward.1}
  #allocation0 [shape = 'u32[]', space=smem, size = 0x4, offset = 0x4, fixed_abs, tag = 'smem constant byte address 0x4 - core index']
  #allocation1 [shape = 'u32[144,128]{1,0:T(1,128)}', space=vmem, size = 0x12000, scoped, tag = 'internal scratch']
  %s0 = inlined_call_operand.vmem [shape: bf16[2,8,1024], index: 0, kind: input, shape index: {}]
  %s1 = inlined_call_operand.vmem [shape: bf16[1024,256], index: 1, kind: input, shape index: {}]
  %s2 = inlined_call_operand.vmem [shape: bf16[256,128], index: 2, kind: input, shape index: {}]
  %s3 = inlined_call_operand.vmem [shape: f32[8,256], index: 3, kind: input, shape index: {}]
  %s4 = inlined_call_operand.vmem [shape: f32[16,128], index: 4, kind: output, shape index: {}]
  %s5 = sld [smem:[#allocation0]]
  $region49: #{corelnet_forward.1} parent=0
    _
  %s7 = ssub.s32 1, %s5
  %s8 = scalar_select 0, %s7, %s5
  loop: start=0, step=1, limit=4
  $region2: #{corelnet_forward.1} parent=0 // loop_pre_header
    _
  $region3: #{corelnet_forward.1} parent=0 // loop_header
    %s10 = sphi 0, %s14
    %p11 = scmp.ge.s32.totalorder %s10, 4
    %s20 = sphi 0, %s22
    %s23 = sphi 0, %s20
    %s24 = sphi 0, %s23
    %s40 = sphi 0, %s24
    %s44 = sphi 0, %s44
    %s46 = sphi 0, %s44
    %s47 = sphi 0, %s46
    %s61 = sphi 0, %s47
    %s65 = sphi 0, %s65
    %s67 = sphi 0, %s65
    %s68 = sphi 0, %s67
    %s82 = sphi 0, %s68
    %s86 = sphi 0, %s86
    %s88 = sphi 0, %s86
    %s89 = sphi 0, %s88
    %s103 = sphi 0, %s89
    %s109 = sphi 0, %s111
    %s112 = sphi 0, %s109
    %s113 = sphi 0, %s112
    %s129 = sphi 0, %s113
  $region4: #{corelnet_forward.1} parent=0 // loop_header_branch
    %13 = sbr.rel (%p11) target = $region8
  $region5: #{corelnet_forward.1} parent=0 // loop_body
    %s15 = ssub.s32 %s10, 1
    %s16 = ssub.s32 %s10, 2
    %s17 = sadd.s32 %s10, 1
    %s18 = ssub.s32 %s10, %s17
    %p19 = scmp.eq.s32.totalorder %s18, 0
    %s21 = sadd.s32 %s20, 1
    %s22 = scalar_select %p19, %s20, %s21
    %p25 = pneg %p19
    %p26 = scmp.eq.s32.totalorder %s10, 1
    %p27 = por %p25, %p26
    %p28 = scmp.ne.s32.totalorder %s20, %s23
    %p29 = scmp.eq.s32.totalorder %s10, 0
    %p30 = por %p28, %p29
    %p31 = scmp.ne.s32.totalorder %s20, %s23
    %p32 = scmp.eq.s32.totalorder %s15, 1
    %p33 = por %p31, %p32
    %p34 = scmp.ne.s32.totalorder %s23, %s24
    %p35 = scmp.eq.s32.totalorder %s15, 0
    %p36 = por %p34, %p35
    %p37 = scmp.ne.s32.totalorder %s23, %s24
    %p38 = scmp.eq.s32.totalorder %s16, 1
    %p39 = por %p37, %p38
    %p41 = scmp.ne.s32.totalorder %s24, %s40
    %p42 = scmp.eq.s32.totalorder %s16, 0
    %p43 = por %p41, %p42
    %s45 = sadd.s32 %s44, 1
    %p48 = scmp.eq.s32.totalorder %s10, 1
    %p49 = scmp.ne.s32.totalorder %s44, %s46
    %p50 = scmp.eq.s32.totalorder %s10, 0
    %p51 = por %p49, %p50
    %p52 = scmp.ne.s32.totalorder %s44, %s46
    %p53 = scmp.eq.s32.totalorder %s15, 1
    %p54 = por %p52, %p53
    %p55 = scmp.ne.s32.totalorder %s46, %s47
    %p56 = scmp.eq.s32.totalorder %s15, 0
    %p57 = por %p55, %p56
    %p58 = scmp.ne.s32.totalorder %s46, %s47
    %p59 = scmp.eq.s32.totalorder %s16, 1
    %p60 = por %p58, %p59
    %p62 = scmp.ne.s32.totalorder %s47, %s61
    %p63 = scmp.eq.s32.totalorder %s16, 0
    %p64 = por %p62, %p63
    %s66 = sadd.s32 %s65, 1
    %p69 = scmp.eq.s32.totalorder %s10, 1
    %p70 = scmp.ne.s32.totalorder %s65, %s67
    %p71 = scmp.eq.s32.totalorder %s10, 0
    %p72 = por %p70, %p71
    %p73 = scmp.ne.s32.totalorder %s65, %s67
    %p74 = scmp.eq.s32.totalorder %s15, 1
    %p75 = por %p73, %p74
    %p76 = scmp.ne.s32.totalorder %s67, %s68
    %p77 = scmp.eq.s32.totalorder %s15, 0
    %p78 = por %p76, %p77
    %p79 = scmp.ne.s32.totalorder %s67, %s68
    %p80 = scmp.eq.s32.totalorder %s16, 1
    %p81 = por %p79, %p80
    %p83 = scmp.ne.s32.totalorder %s68, %s82
    %p84 = scmp.eq.s32.totalorder %s16, 0
    %p85 = por %p83, %p84
    %s87 = sadd.s32 %s86, 1
    %p90 = scmp.eq.s32.totalorder %s10, 1
    %p91 = scmp.ne.s32.totalorder %s86, %s88
    %p92 = scmp.eq.s32.totalorder %s10, 0
    %p93 = por %p91, %p92
    %p94 = scmp.ne.s32.totalorder %s86, %s88
    %p95 = scmp.eq.s32.totalorder %s15, 1
    %p96 = por %p94, %p95
    %p97 = scmp.ne.s32.totalorder %s88, %s89
    %p98 = scmp.eq.s32.totalorder %s15, 0
    %p99 = por %p97, %p98
    %p100 = scmp.ne.s32.totalorder %s88, %s89
    %p101 = scmp.eq.s32.totalorder %s16, 1
    %p102 = por %p100, %p101
    %p104 = scmp.ne.s32.totalorder %s89, %s103
    %p105 = scmp.eq.s32.totalorder %s16, 0
    %p106 = por %p104, %p105
    %s107 = ssub.s32 %s10, %s17
    %p108 = scmp.eq.s32.totalorder %s107, 0
    %s110 = sadd.s32 %s109, 1
    %s111 = scalar_select %p108, %s109, %s110
    %p114 = pneg %p108
    %p115 = scmp.eq.s32.totalorder %s10, 1
    %p116 = por %p114, %p115
    %p117 = scmp.ne.s32.totalorder %s109, %s112
    %p118 = scmp.eq.s32.totalorder %s10, 0
    %p119 = por %p117, %p118
    %p120 = scmp.ne.s32.totalorder %s109, %s112
    %p121 = scmp.eq.s32.totalorder %s15, 1
    %p122 = por %p120, %p121
    %p123 = scmp.ne.s32.totalorder %s112, %s113
    %p124 = scmp.eq.s32.totalorder %s15, 0
    %p125 = por %p123, %p124
    %p126 = scmp.ne.s32.totalorder %s112, %s113
    %p127 = scmp.eq.s32.totalorder %s16, 1
    %p128 = por %p126, %p127
    %p130 = scmp.ne.s32.totalorder %s113, %s129
    %p131 = scmp.eq.s32.totalorder %s16, 0
    %p132 = por %p130, %p131
    %p133 = scmp.le.s32.totalorder 1, %s10
    %p134 = scmp.lt.s32.totalorder %s10, 3
    %p135 = pnand %p133, %p134
    %p136 = pneg %p135
    // Predicated region
    $region9: #{corelnet_forward.1} parent=5 // pred_check
      _
    $region10: #{corelnet_forward.1} parent=5 // pred_check_branch
      %138 = sbr.rel (%p135) target = $region12
    $region11: #{corelnet_forward.1} parent=5 // pred_region
      %s139 = ssub.s32 %s10, 1
      // Predicated region
      $region13: #{corelnet_forward.1} parent=11 // pred_check
        %p140 = pneg %p57
      $region14: #{corelnet_forward.1} parent=11 // pred_check_branch
        %142 = sbr.rel (%p140) target = $region16
      $region15: #{corelnet_forward.1} parent=11 // pred_region
        _
      $region16: #{corelnet_forward.1} parent=11 // pred_fallthru
        _
      // Predicated region
      $region17: #{corelnet_forward.1} parent=11 // pred_check
        %p143 = pneg %p78
      $region18: #{corelnet_forward.1} parent=11 // pred_check_branch
        %145 = sbr.rel (%p143) target = $region20
      $region19: #{corelnet_forward.1} parent=11 // pred_region
        _
      $region20: #{corelnet_forward.1} parent=11 // pred_fallthru
        _
      // Predicated region
      $region21: #{corelnet_forward.1} parent=11 // pred_check
        %p146 = pneg %p99
      $region22: #{corelnet_forward.1} parent=11 // pred_check_branch
        %148 = sbr.rel (%p146) target = $region24
      $region23: #{corelnet_forward.1} parent=11 // pred_region
        _
      $region24: #{corelnet_forward.1} parent=11 // pred_fallthru
        _
    $region12: #{corelnet_forward.1} parent=5 // pred_fallthru
      _
    %p149 = scmp.lt.s32.totalorder %s10, 2
    // Predicated region
    $region25: #{corelnet_forward.1} parent=5 // pred_check
      %p150 = pneg %p149
    $region26: #{corelnet_forward.1} parent=5 // pred_check_branch
      %152 = sbr.rel (%p150) target = $region28
    $region27: #{corelnet_forward.1} parent=5 // pred_region
      // Predicated region
      $region29: #{corelnet_forward.1} parent=27 // pred_check
        %p153 = pneg %p30
      $region30: #{corelnet_forward.1} parent=27 // pred_check_branch
        %155 = sbr.rel (%p153) target = $region32
      $region31: #{corelnet_forward.1} parent=27 // pred_region
        %p156 = scmp.lt.s32.totalorder %s10, 1
        %s157 = scalar_select %p156, %s10, 1
        %s158 = smul.addr %s157, 8
        %s159 = smul.addr %s158, 4
        %s160 = scalar_lea.vmem %s0, %s159
      $region32: #{corelnet_forward.1} parent=27 // pred_fallthru
        _
    $region28: #{corelnet_forward.1} parent=5 // pred_fallthru
      _
    %p161 = scmp.le.s32.totalorder 1, %s10
    %p162 = scmp.lt.s32.totalorder %s10, 3
    %p163 = pnand %p161, %p162
    %p164 = pneg %p163
    // Predicated region
    $region33: #{corelnet_forward.1} parent=5 // pred_check
      _
    $region34: #{corelnet_forward.1} parent=5 // pred_check_branch
      %166 = sbr.rel (%p163) target = $region36
    $region35: #{corelnet_forward.1} parent=5 // pred_region
      %s167 = ssub.s32 %s10, 1
      %p168 = scmp.lt.s32.totalorder %s15, 1
      %s169 = scalar_select %p168, %s15, 1
      %s170 = smul.addr %s169, 8
      %s171 = smul.addr %s170, 4
      %s172 = scalar_lea.vmem %s0, %s171
      %p173 = pneg %p36
      %p174 = pneg %p33
      %p175 = pneg %p57
      %p176 = pneg %p54
      %p177 = pneg %p78
      %p178 = pneg %p75
      %p179 = pneg %p99
      %p180 = pneg %p96
      %p181 = pneg %p125
      %p182 = pneg %p122
      %p183 = scmp.lt.s32.totalorder %s15, 1
      %s184 = scalar_select %p183, %s15, 1
      %s185 = smul.addr %s184, 8
      %s186 = scalar_lea.vmem %s4, %s185
      %p187 = scmp.lt.s32.totalorder %s15, 1
      %s188 = scalar_select %p187, %s15, 1
      %s189 = smul.addr %s188, 8
      %s190 = smul.addr %s189, 4
      %s191 = scalar_lea.vmem %s0, %s190
      %p192 = scmp.lt.s32.totalorder %s15, 1
      %s193 = scalar_select %p192, %s15, 1
      %s194 = smul.addr %s193, 8
      %s195 = scalar_lea.vmem %s4, %s194
      %v197 = vld [vmem:[%s191] sm:$0xff]
      %v198 = vld [vmem:[%s191 + $0x8] sm:$0xff]
      %v199 = vld [vmem:[%s191 + $0x10] sm:$0xff]
      %v200 = vld [vmem:[%s191 + $0x18] sm:$0xff]
      %v201 = vld [vmem:[%s1] sm:$0xff]
      %v202 = vld [vmem:[%s1 + $0x8] sm:$0xff]
      %v203 = vld [vmem:[%s1 + $0x10] sm:$0xff]
      %v204 = vld [vmem:[%s1 + $0x18] sm:$0xff]
      %v205 = vld [vmem:[%s1 + $0x20] sm:$0xff]
      %v206 = vld [vmem:[%s1 + $0x28] sm:$0xff]
      %v207 = vld [vmem:[%s1 + $0x30] sm:$0xff]
      %v208 = vld [vmem:[%s1 + $0x38] sm:$0xff]
      %v209 = vld [vmem:[%s1 + $0x40] sm:$0xff]
      %v210 = vld [vmem:[%s1 + $0x48] sm:$0xff]
      %v211 = vld [vmem:[%s1 + $0x50] sm:$0xff]
      %v212 = vld [vmem:[%s1 + $0x58] sm:$0xff]
      %v213 = vld [vmem:[%s1 + $0x60] sm:$0xff]
      %v214 = vld [vmem:[%s1 + $0x68] sm:$0xff]
      %v215 = vld [vmem:[%s1 + $0x70] sm:$0xff]
      %v216 = vld [vmem:[%s1 + $0x78] sm:$0xff]
      %v217 = vld [vmem:[%s1 + $0x80] sm:$0xff]
      %v218 = vld [vmem:[%s1 + $0x88] sm:$0xff]
      %v219 = vld [vmem:[%s1 + $0x90] sm:$0xff]
      %v220 = vld [vmem:[%s1 + $0x98] sm:$0xff]
      %v221 = vld [vmem:[%s1 + $0xa0] sm:$0xff]
      %v222 = vld [vmem:[%s1 + $0xa8] sm:$0xff]
      %v223 = vld [vmem:[%s1 + $0xb0] sm:$0xff]
      %v224 = vld [vmem:[%s1 + $0xb8] sm:$0xff]
      %v225 = vld [vmem:[%s1 + $0xc0] sm:$0xff]
      %v226 = vld [vmem:[%s1 + $0xc8] sm:$0xff]
      %v227 = vld [vmem:[%s1 + $0xd0] sm:$0xff]
      %v228 = vld [vmem:[%s1 + $0xd8] sm:$0xff]
      %v229 = vld [vmem:[%s1 + $0xe0] sm:$0xff]
      %v230 = vld [vmem:[%s1 + $0xe8] sm:$0xff]
      %v231 = vld [vmem:[%s1 + $0xf0] sm:$0xff]
      %v232 = vld [vmem:[%s1 + $0xf8] sm:$0xff]
      %v233 = vld [vmem:[%s1 + $0x100] sm:$0xff]
      %v234 = vld [vmem:[%s1 + $0x108] sm:$0xff]
      %v235 = vld [vmem:[%s1 + $0x110] sm:$0xff]
      %v236 = vld [vmem:[%s1 + $0x118] sm:$0xff]
      %v237 = vld [vmem:[%s1 + $0x120] sm:$0xff]
      %v238 = vld [vmem:[%s1 + $0x128] sm:$0xff]
      %v239 = vld [vmem:[%s1 + $0x130] sm:$0xff]
      %v240 = vld [vmem:[%s1 + $0x138] sm:$0xff]
      %v241 = vld [vmem:[%s1 + $0x140] sm:$0xff]
      %v242 = vld [vmem:[%s1 + $0x148] sm:$0xff]
      %v243 = vld [vmem:[%s1 + $0x150] sm:$0xff]
      %v244 = vld [vmem:[%s1 + $0x158] sm:$0xff]
      %v245 = vld [vmem:[%s1 + $0x160] sm:$0xff]
      %v246 = vld [vmem:[%s1 + $0x168] sm:$0xff]
      %v247 = vld [vmem:[%s1 + $0x170] sm:$0xff]
      %v248 = vld [vmem:[%s1 + $0x178] sm:$0xff]
      %v249 = vld [vmem:[%s1 + $0x180] sm:$0xff]
      %v250 = vld [vmem:[%s1 + $0x188] sm:$0xff]
      %v251 = vld [vmem:[%s1 + $0x190] sm:$0xff]
      %v252 = vld [vmem:[%s1 + $0x198] sm:$0xff]
      %v253 = vld [vmem:[%s1 + $0x1a0] sm:$0xff]
      %v254 = vld [vmem:[%s1 + $0x1a8] sm:$0xff]
      %v255 = vld [vmem:[%s1 + $0x1b0] sm:$0xff]
      %v256 = vld [vmem:[%s1 + $0x1b8] sm:$0xff]
      %v257 = vld [vmem:[%s1 + $0x1c0] sm:$0xff]
      %v258 = vld [vmem:[%s1 + $0x1c8] sm:$0xff]
      %v259 = vld [vmem:[%s1 + $0x1d0] sm:$0xff]
      %v260 = vld [vmem:[%s1 + $0x1d8] sm:$0xff]
      %v261 = vld [vmem:[%s1 + $0x1e0] sm:$0xff]
      %v262 = vld [vmem:[%s1 + $0x1e8] sm:$0xff]
      %v263 = vld [vmem:[%s1 + $0x1f0] sm:$0xff]
      %v264 = vld [vmem:[%s1 + $0x1f8] sm:$0xff]
      %v265 = vld [vmem:[%s1 + $0x200] sm:$0xff]
      %v266 = vld [vmem:[%s1 + $0x208] sm:$0xff]
      %v267 = vld [vmem:[%s1 + $0x210] sm:$0xff]
      %v268 = vld [vmem:[%s1 + $0x218] sm:$0xff]
      %v269 = vld [vmem:[%s1 + $0x220] sm:$0xff]
      %v270 = vld [vmem:[%s1 + $0x228] sm:$0xff]
      %v271 = vld [vmem:[%s1 + $0x230] sm:$0xff]
      %v272 = vld [vmem:[%s1 + $0x238] sm:$0xff]
      %v273 = vld [vmem:[%s1 + $0x240] sm:$0xff]
      %v274 = vld [vmem:[%s1 + $0x248] sm:$0xff]
      %v275 = vld [vmem:[%s1 + $0x250] sm:$0xff]
      %v276 = vld [vmem:[%s1 + $0x258] sm:$0xff]
      %v277 = vld [vmem:[%s1 + $0x260] sm:$0xff]
      %v278 = vld [vmem:[%s1 + $0x268] sm:$0xff]
      %v279 = vld [vmem:[%s1 + $0x270] sm:$0xff]
      %v280 = vld [vmem:[%s1 + $0x278] sm:$0xff]
      %v281 = vld [vmem:[%s1 + $0x280] sm:$0xff]
      %v282 = vld [vmem:[%s1 + $0x288] sm:$0xff]
      %v283 = vld [vmem:[%s1 + $0x290] sm:$0xff]
      %v284 = vld [vmem:[%s1 + $0x298] sm:$0xff]
      %v285 = vld [vmem:[%s1 + $0x2a0] sm:$0xff]
      %v286 = vld [vmem:[%s1 + $0x2a8] sm:$0xff]
      %v287 = vld [vmem:[%s1 + $0x2b0] sm:$0xff]
      %v288 = vld [vmem:[%s1 + $0x2b8] sm:$0xff]
      %v289 = vld [vmem:[%s1 + $0x2c0] sm:$0xff]
      %v290 = vld [vmem:[%s1 + $0x2c8] sm:$0xff]
      %v291 = vld [vmem:[%s1 + $0x2d0] sm:$0xff]
      %v292 = vld [vmem:[%s1 + $0x2d8] sm:$0xff]
      %v293 = vld [vmem:[%s1 + $0x2e0] sm:$0xff]
      %v294 = vld [vmem:[%s1 + $0x2e8] sm:$0xff]
      %v295 = vld [vmem:[%s1 + $0x2f0] sm:$0xff]
      %v296 = vld [vmem:[%s1 + $0x2f8] sm:$0xff]
      %v297 = vld [vmem:[%s1 + $0x300] sm:$0xff]
      %v298 = vld [vmem:[%s1 + $0x308] sm:$0xff]
      %v299 = vld [vmem:[%s1 + $0x310] sm:$0xff]
      %v300 = vld [vmem:[%s1 + $0x318] sm:$0xff]
      %v301 = vld [vmem:[%s1 + $0x320] sm:$0xff]
      %v302 = vld [vmem:[%s1 + $0x328] sm:$0xff]
      %v303 = vld [vmem:[%s1 + $0x330] sm:$0xff]
      %v304 = vld [vmem:[%s1 + $0x338] sm:$0xff]
      %v305 = vld [vmem:[%s1 + $0x340] sm:$0xff]
      %v306 = vld [vmem:[%s1 + $0x348] sm:$0xff]
      %v307 = vld [vmem:[%s1 + $0x350] sm:$0xff]
      %v308 = vld [vmem:[%s1 + $0x358] sm:$0xff]
      %v309 = vld [vmem:[%s1 + $0x360] sm:$0xff]
      %v310 = vld [vmem:[%s1 + $0x368] sm:$0xff]
      %v311 = vld [vmem:[%s1 + $0x370] sm:$0xff]
      %v312 = vld [vmem:[%s1 + $0x378] sm:$0xff]
      %v313 = vld [vmem:[%s1 + $0x380] sm:$0xff]
      %v314 = vld [vmem:[%s1 + $0x388] sm:$0xff]
      %v315 = vld [vmem:[%s1 + $0x390] sm:$0xff]
      %v316 = vld [vmem:[%s1 + $0x398] sm:$0xff]
      %v317 = vld [vmem:[%s1 + $0x3a0] sm:$0xff]
      %v318 = vld [vmem:[%s1 + $0x3a8] sm:$0xff]
      %v319 = vld [vmem:[%s1 + $0x3b0] sm:$0xff]
      %v320 = vld [vmem:[%s1 + $0x3b8] sm:$0xff]
      %v321 = vld [vmem:[%s1 + $0x3c0] sm:$0xff]
      %v322 = vld [vmem:[%s1 + $0x3c8] sm:$0xff]
      %v323 = vld [vmem:[%s1 + $0x3d0] sm:$0xff]
      %v324 = vld [vmem:[%s1 + $0x3d8] sm:$0xff]
      %v325 = vld [vmem:[%s1 + $0x3e0] sm:$0xff]
      %v326 = vld [vmem:[%s1 + $0x3e8] sm:$0xff]
      %v327 = vld [vmem:[%s1 + $0x3f0] sm:$0xff]
      %v328 = vld [vmem:[%s1 + $0x3f8] sm:$0xff]
      %v329 = vld [vmem:[%s3] ss:$8 sm:$0x3]
      %v331 = vlaneseq
      %v332 = vshrl.u32 %v331, 7
      %v333 = vsub.s32 0, %v332
      %v334 = vrot.slane %v329, %v333
      %v335 = vlaneseq
      %v336 = vshrl.u32 %v335, 7
      %v337 = vsub.s32 1, %v336
      %v338 = vrot.slane %v329, %v337
      %v345 = vunpack.c.l.b16 %v197
      %v346 = vunpack.c.h.b16 %v197
      %v347 = vunpack.c.l.b16 %v198
      %v348 = vunpack.c.h.b16 %v198
      %v349 = vunpack.c.l.b16 %v199
      %v350 = vunpack.c.h.b16 %v199
      %v351 = vunpack.c.l.b16 %v200
      %v352 = vunpack.c.h.b16 %v200
      %v353 = vpack.c.b16 %v345, %v345
      %v354 = vpack.c.b16 %v346, %v346
      %v355 = vpack.c.b16 %v347, %v347
      %v356 = vpack.c.b16 %v348, %v348
      %v357 = vpack.c.b16 %v349, %v349
      %v358 = vpack.c.b16 %v350, %v350
      %v359 = vpack.c.b16 %v351, %v351
      %v360 = vpack.c.b16 %v352, %v352
      %v497 = vunpack.c.l.b16 %v201
      %v498 = vunpack.c.h.b16 %v201
      %v499 = vunpack.c.l.b16 %v202
      %v500 = vunpack.c.h.b16 %v202
      %v501 = vunpack.c.l.b16 %v203
      %v502 = vunpack.c.h.b16 %v203
      %v503 = vunpack.c.l.b16 %v204
      %v504 = vunpack.c.h.b16 %v204
      %v505 = vunpack.c.l.b16 %v205
      %v506 = vunpack.c.h.b16 %v205
      %v507 = vunpack.c.l.b16 %v206
      %v508 = vunpack.c.h.b16 %v206
      %v509 = vunpack.c.l.b16 %v207
      %v510 = vunpack.c.h.b16 %v207
      %v511 = vunpack.c.l.b16 %v208
      %v512 = vunpack.c.h.b16 %v208
      %v513 = vunpack.c.l.b16 %v209
      %v514 = vunpack.c.h.b16 %v209
      %v515 = vunpack.c.l.b16 %v210
      %v516 = vunpack.c.h.b16 %v210
      %v517 = vunpack.c.l.b16 %v211
      %v518 = vunpack.c.h.b16 %v211
      %v519 = vunpack.c.l.b16 %v212
      %v520 = vunpack.c.h.b16 %v212
      %v521 = vunpack.c.l.b16 %v213
      %v522 = vunpack.c.h.b16 %v213
      %v523 = vunpack.c.l.b16 %v214
      %v524 = vunpack.c.h.b16 %v214
      %v525 = vunpack.c.l.b16 %v215
      %v526 = vunpack.c.h.b16 %v215
      %v527 = vunpack.c.l.b16 %v216
      %v528 = vunpack.c.h.b16 %v216
      %v529 = vunpack.c.l.b16 %v217
      %v530 = vunpack.c.h.b16 %v217
      %v531 = vunpack.c.l.b16 %v218
      %v532 = vunpack.c.h.b16 %v218
      %v533 = vunpack.c.l.b16 %v219
      %v534 = vunpack.c.h.b16 %v219
      %v535 = vunpack.c.l.b16 %v220
      %v536 = vunpack.c.h.b16 %v220
      %v537 = vunpack.c.l.b16 %v221
      %v538 = vunpack.c.h.b16 %v221
      %v539 = vunpack.c.l.b16 %v222
      %v540 = vunpack.c.h.b16 %v222
      %v541 = vunpack.c.l.b16 %v223
      %v542 = vunpack.c.h.b16 %v223
      %v543 = vunpack.c.l.b16 %v224
      %v544 = vunpack.c.h.b16 %v224
      %v545 = vunpack.c.l.b16 %v225
      %v546 = vunpack.c.h.b16 %v225
      %v547 = vunpack.c.l.b16 %v226
      %v548 = vunpack.c.h.b16 %v226
      %v549 = vunpack.c.l.b16 %v227
      %v550 = vunpack.c.h.b16 %v227
      %v551 = vunpack.c.l.b16 %v228
      %v552 = vunpack.c.h.b16 %v228
      %v553 = vunpack.c.l.b16 %v229
      %v554 = vunpack.c.h.b16 %v229
      %v555 = vunpack.c.l.b16 %v230
      %v556 = vunpack.c.h.b16 %v230
      %v557 = vunpack.c.l.b16 %v231
      %v558 = vunpack.c.h.b16 %v231
      %v559 = vunpack.c.l.b16 %v232
      %v560 = vunpack.c.h.b16 %v232
      %v561 = vunpack.c.l.b16 %v233
      %v562 = vunpack.c.h.b16 %v233
      %v563 = vunpack.c.l.b16 %v234
      %v564 = vunpack.c.h.b16 %v234
      %v565 = vunpack.c.l.b16 %v235
      %v566 = vunpack.c.h.b16 %v235
      %v567 = vunpack.c.l.b16 %v236
      %v568 = vunpack.c.h.b16 %v236
      %v569 = vunpack.c.l.b16 %v237
      %v570 = vunpack.c.h.b16 %v237
      %v571 = vunpack.c.l.b16 %v238
      %v572 = vunpack.c.h.b16 %v238
      %v573 = vunpack.c.l.b16 %v239
      %v574 = vunpack.c.h.b16 %v239
      %v575 = vunpack.c.l.b16 %v240
      %v576 = vunpack.c.h.b16 %v240
      %v577 = vunpack.c.l.b16 %v241
      %v578 = vunpack.c.h.b16 %v241
      %v579 = vunpack.c.l.b16 %v242
      %v580 = vunpack.c.h.b16 %v242
      %v581 = vunpack.c.l.b16 %v243
      %v582 = vunpack.c.h.b16 %v243
      %v583 = vunpack.c.l.b16 %v244
      %v584 = vunpack.c.h.b16 %v244
      %v585 = vunpack.c.l.b16 %v245
      %v586 = vunpack.c.h.b16 %v245
      %v587 = vunpack.c.l.b16 %v246
      %v588 = vunpack.c.h.b16 %v246
      %v589 = vunpack.c.l.b16 %v247
      %v590 = vunpack.c.h.b16 %v247
      %v591 = vunpack.c.l.b16 %v248
      %v592 = vunpack.c.h.b16 %v248
      %v593 = vunpack.c.l.b16 %v249
      %v594 = vunpack.c.h.b16 %v249
      %v595 = vunpack.c.l.b16 %v250
      %v596 = vunpack.c.h.b16 %v250
      %v597 = vunpack.c.l.b16 %v251
      %v598 = vunpack.c.h.b16 %v251
      %v599 = vunpack.c.l.b16 %v252
      %v600 = vunpack.c.h.b16 %v252
      %v601 = vunpack.c.l.b16 %v253
      %v602 = vunpack.c.h.b16 %v253
      %v603 = vunpack.c.l.b16 %v254
      %v604 = vunpack.c.h.b16 %v254
      %v605 = vunpack.c.l.b16 %v255
      %v606 = vunpack.c.h.b16 %v255
      %v607 = vunpack.c.l.b16 %v256
      %v608 = vunpack.c.h.b16 %v256
      %v609 = vunpack.c.l.b16 %v257
      %v610 = vunpack.c.h.b16 %v257
      %v611 = vunpack.c.l.b16 %v258
      %v612 = vunpack.c.h.b16 %v258
      %v613 = vunpack.c.l.b16 %v259
      %v614 = vunpack.c.h.b16 %v259
      %v615 = vunpack.c.l.b16 %v260
      %v616 = vunpack.c.h.b16 %v260
      %v617 = vunpack.c.l.b16 %v261
      %v618 = vunpack.c.h.b16 %v261
      %v619 = vunpack.c.l.b16 %v262
      %v620 = vunpack.c.h.b16 %v262
      %v621 = vunpack.c.l.b16 %v263
      %v622 = vunpack.c.h.b16 %v263
      %v623 = vunpack.c.l.b16 %v264
      %v624 = vunpack.c.h.b16 %v264
      %v625 = vunpack.c.l.b16 %v265
      %v626 = vunpack.c.h.b16 %v265
      %v627 = vunpack.c.l.b16 %v266
      %v628 = vunpack.c.h.b16 %v266
      %v629 = vunpack.c.l.b16 %v267
      %v630 = vunpack.c.h.b16 %v267
      %v631 = vunpack.c.l.b16 %v268
      %v632 = vunpack.c.h.b16 %v268
      %v633 = vunpack.c.l.b16 %v269
      %v634 = vunpack.c.h.b16 %v269
      %v635 = vunpack.c.l.b16 %v270
      %v636 = vunpack.c.h.b16 %v270
      %v637 = vunpack.c.l.b16 %v271
      %v638 = vunpack.c.h.b16 %v271
      %v639 = vunpack.c.l.b16 %v272
      %v640 = vunpack.c.h.b16 %v272
      %v641 = vunpack.c.l.b16 %v273
      %v642 = vunpack.c.h.b16 %v273
      %v643 = vunpack.c.l.b16 %v274
      %v644 = vunpack.c.h.b16 %v274
      %v645 = vunpack.c.l.b16 %v275
      %v646 = vunpack.c.h.b16 %v275
      %v647 = vunpack.c.l.b16 %v276
      %v648 = vunpack.c.h.b16 %v276
      %v649 = vunpack.c.l.b16 %v277
      %v650 = vunpack.c.h.b16 %v277
      %v651 = vunpack.c.l.b16 %v278
      %v652 = vunpack.c.h.b16 %v278
      %v653 = vunpack.c.l.b16 %v279
      %v654 = vunpack.c.h.b16 %v279
      %v655 = vunpack.c.l.b16 %v280
      %v656 = vunpack.c.h.b16 %v280
      %v657 = vunpack.c.l.b16 %v281
      %v658 = vunpack.c.h.b16 %v281
      %v659 = vunpack.c.l.b16 %v282
      %v660 = vunpack.c.h.b16 %v282
      %v661 = vunpack.c.l.b16 %v283
      %v662 = vunpack.c.h.b16 %v283
      %v663 = vunpack.c.l.b16 %v284
      %v664 = vunpack.c.h.b16 %v284
      %v665 = vunpack.c.l.b16 %v285
      %v666 = vunpack.c.h.b16 %v285
      %v667 = vunpack.c.l.b16 %v286
      %v668 = vunpack.c.h.b16 %v286
      %v669 = vunpack.c.l.b16 %v287
      %v670 = vunpack.c.h.b16 %v287
      %v671 = vunpack.c.l.b16 %v288
      %v672 = vunpack.c.h.b16 %v288
      %v673 = vunpack.c.l.b16 %v289
      %v674 = vunpack.c.h.b16 %v289
      %v675 = vunpack.c.l.b16 %v290
      %v676 = vunpack.c.h.b16 %v290
      %v677 = vunpack.c.l.b16 %v291
      %v678 = vunpack.c.h.b16 %v291
      %v679 = vunpack.c.l.b16 %v292
      %v680 = vunpack.c.h.b16 %v292
      %v681 = vunpack.c.l.b16 %v293
      %v682 = vunpack.c.h.b16 %v293
      %v683 = vunpack.c.l.b16 %v294
      %v684 = vunpack.c.h.b16 %v294
      %v685 = vunpack.c.l.b16 %v295
      %v686 = vunpack.c.h.b16 %v295
      %v687 = vunpack.c.l.b16 %v296
      %v688 = vunpack.c.h.b16 %v296
      %v689 = vunpack.c.l.b16 %v297
      %v690 = vunpack.c.h.b16 %v297
      %v691 = vunpack.c.l.b16 %v298
      %v692 = vunpack.c.h.b16 %v298
      %v693 = vunpack.c.l.b16 %v299
      %v694 = vunpack.c.h.b16 %v299
      %v695 = vunpack.c.l.b16 %v300
      %v696 = vunpack.c.h.b16 %v300
      %v697 = vunpack.c.l.b16 %v301
      %v698 = vunpack.c.h.b16 %v301
      %v699 = vunpack.c.l.b16 %v302
      %v700 = vunpack.c.h.b16 %v302
      %v701 = vunpack.c.l.b16 %v303
      %v702 = vunpack.c.h.b16 %v303
      %v703 = vunpack.c.l.b16 %v304
      %v704 = vunpack.c.h.b16 %v304
      %v705 = vunpack.c.l.b16 %v305
      %v706 = vunpack.c.h.b16 %v305
      %v707 = vunpack.c.l.b16 %v306
      %v708 = vunpack.c.h.b16 %v306
      %v709 = vunpack.c.l.b16 %v307
      %v710 = vunpack.c.h.b16 %v307
      %v711 = vunpack.c.l.b16 %v308
      %v712 = vunpack.c.h.b16 %v308
      %v713 = vunpack.c.l.b16 %v309
      %v714 = vunpack.c.h.b16 %v309
      %v715 = vunpack.c.l.b16 %v310
      %v716 = vunpack.c.h.b16 %v310
      %v717 = vunpack.c.l.b16 %v311
      %v718 = vunpack.c.h.b16 %v311
      %v719 = vunpack.c.l.b16 %v312
      %v720 = vunpack.c.h.b16 %v312
      %v721 = vunpack.c.l.b16 %v313
      %v722 = vunpack.c.h.b16 %v313
      %v723 = vunpack.c.l.b16 %v314
      %v724 = vunpack.c.h.b16 %v314
      %v725 = vunpack.c.l.b16 %v315
      %v726 = vunpack.c.h.b16 %v315
      %v727 = vunpack.c.l.b16 %v316
      %v728 = vunpack.c.h.b16 %v316
      %v729 = vunpack.c.l.b16 %v317
      %v730 = vunpack.c.h.b16 %v317
      %v731 = vunpack.c.l.b16 %v318
      %v732 = vunpack.c.h.b16 %v318
      %v733 = vunpack.c.l.b16 %v319
      %v734 = vunpack.c.h.b16 %v319
      %v735 = vunpack.c.l.b16 %v320
      %v736 = vunpack.c.h.b16 %v320
      %v737 = vunpack.c.l.b16 %v321
      %v738 = vunpack.c.h.b16 %v321
      %v739 = vunpack.c.l.b16 %v322
      %v740 = vunpack.c.h.b16 %v322
      %v741 = vunpack.c.l.b16 %v323
      %v742 = vunpack.c.h.b16 %v323
      %v743 = vunpack.c.l.b16 %v324
      %v744 = vunpack.c.h.b16 %v324
      %v745 = vunpack.c.l.b16 %v325
      %v746 = vunpack.c.h.b16 %v325
      %v747 = vunpack.c.l.b16 %v326
      %v748 = vunpack.c.h.b16 %v326
      %v749 = vunpack.c.l.b16 %v327
      %v750 = vunpack.c.h.b16 %v327
      %v751 = vunpack.c.l.b16 %v328
      %v752 = vunpack.c.h.b16 %v328
      %v753 = vpack.c.b16 %v499, %v497
      %v754 = vpack.c.b16 %v500, %v498
      %v755 = vpack.c.b16 %v503, %v501
      %v756 = vpack.c.b16 %v504, %v502
      %v757 = vpack.c.b16 %v507, %v505
      %v758 = vpack.c.b16 %v508, %v506
      %v759 = vpack.c.b16 %v511, %v509
      %v760 = vpack.c.b16 %v512, %v510
      %v761 = vpack.c.b16 %v515, %v513
      %v762 = vpack.c.b16 %v516, %v514
      %v763 = vpack.c.b16 %v519, %v517
      %v764 = vpack.c.b16 %v520, %v518
      %v765 = vpack.c.b16 %v523, %v521
      %v766 = vpack.c.b16 %v524, %v522
      %v767 = vpack.c.b16 %v527, %v525
      %v768 = vpack.c.b16 %v528, %v526
      %v769 = vpack.c.b16 %v531, %v529
      %v770 = vpack.c.b16 %v532, %v530
      %v771 = vpack.c.b16 %v535, %v533
      %v772 = vpack.c.b16 %v536, %v534
      %v773 = vpack.c.b16 %v539, %v537
      %v774 = vpack.c.b16 %v540, %v538
      %v775 = vpack.c.b16 %v543, %v541
      %v776 = vpack.c.b16 %v544, %v542
      %v777 = vpack.c.b16 %v547, %v545
      %v778 = vpack.c.b16 %v548, %v546
      %v779 = vpack.c.b16 %v551, %v549
      %v780 = vpack.c.b16 %v552, %v550
      %v781 = vpack.c.b16 %v555, %v553
      %v782 = vpack.c.b16 %v556, %v554
      %v783 = vpack.c.b16 %v559, %v557
      %v784 = vpack.c.b16 %v560, %v558
      %v785 = vpack.c.b16 %v563, %v561
      %v786 = vpack.c.b16 %v564, %v562
      %v787 = vpack.c.b16 %v567, %v565
      %v788 = vpack.c.b16 %v568, %v566
      %v789 = vpack.c.b16 %v571, %v569
      %v790 = vpack.c.b16 %v572, %v570
      %v791 = vpack.c.b16 %v575, %v573
      %v792 = vpack.c.b16 %v576, %v574
      %v793 = vpack.c.b16 %v579, %v577
      %v794 = vpack.c.b16 %v580, %v578
      %v795 = vpack.c.b16 %v583, %v581
      %v796 = vpack.c.b16 %v584, %v582
      %v797 = vpack.c.b16 %v587, %v585
      %v798 = vpack.c.b16 %v588, %v586
      %v799 = vpack.c.b16 %v591, %v589
      %v800 = vpack.c.b16 %v592, %v590
      %v801 = vpack.c.b16 %v595, %v593
      %v802 = vpack.c.b16 %v596, %v594
      %v803 = vpack.c.b16 %v599, %v597
      %v804 = vpack.c.b16 %v600, %v598
      %v805 = vpack.c.b16 %v603, %v601
      %v806 = vpack.c.b16 %v604, %v602
      %v807 = vpack.c.b16 %v607, %v605
      %v808 = vpack.c.b16 %v608, %v606
      %v809 = vpack.c.b16 %v611, %v609
      %v810 = vpack.c.b16 %v612, %v610
      %v811 = vpack.c.b16 %v615, %v613
      %v812 = vpack.c.b16 %v616, %v614
      %v813 = vpack.c.b16 %v619, %v617
      %v814 = vpack.c.b16 %v620, %v618
      %v815 = vpack.c.b16 %v623, %v621
      %v816 = vpack.c.b16 %v624, %v622
      %v817 = vpack.c.b16 %v627, %v625
      %v818 = vpack.c.b16 %v628, %v626
      %v819 = vpack.c.b16 %v631, %v629
      %v820 = vpack.c.b16 %v632, %v630
      %v821 = vpack.c.b16 %v635, %v633
      %v822 = vpack.c.b16 %v636, %v634
      %v823 = vpack.c.b16 %v639, %v637
      %v824 = vpack.c.b16 %v640, %v638
      %v825 = vpack.c.b16 %v643, %v641
      %v826 = vpack.c.b16 %v644, %v642
      %v827 = vpack.c.b16 %v647, %v645
      %v828 = vpack.c.b16 %v648, %v646
      %v829 = vpack.c.b16 %v651, %v649
      %v830 = vpack.c.b16 %v652, %v650
      %v831 = vpack.c.b16 %v655, %v653
      %v832 = vpack.c.b16 %v656, %v654
      %v833 = vpack.c.b16 %v659, %v657
      %v834 = vpack.c.b16 %v660, %v658
      %v835 = vpack.c.b16 %v663, %v661
      %v836 = vpack.c.b16 %v664, %v662
      %v837 = vpack.c.b16 %v667, %v665
      %v838 = vpack.c.b16 %v668, %v666
      %v839 = vpack.c.b16 %v671, %v669
      %v840 = vpack.c.b16 %v672, %v670
      %v841 = vpack.c.b16 %v675, %v673
      %v842 = vpack.c.b16 %v676, %v674
      %v843 = vpack.c.b16 %v679, %v677
      %v844 = vpack.c.b16 %v680, %v678
      %v845 = vpack.c.b16 %v683, %v681
      %v846 = vpack.c.b16 %v684, %v682
      %v847 = vpack.c.b16 %v687, %v685
      %v848 = vpack.c.b16 %v688, %v686
      %v849 = vpack.c.b16 %v691, %v689
      %v850 = vpack.c.b16 %v692, %v690
      %v851 = vpack.c.b16 %v695, %v693
      %v852 = vpack.c.b16 %v696, %v694
      %v853 = vpack.c.b16 %v699, %v697
      %v854 = vpack.c.b16 %v700, %v698
      %v855 = vpack.c.b16 %v703, %v701
      %v856 = vpack.c.b16 %v704, %v702
      %v857 = vpack.c.b16 %v707, %v705
      %v858 = vpack.c.b16 %v708, %v706
      %v859 = vpack.c.b16 %v711, %v709
      %v860 = vpack.c.b16 %v712, %v710
      %v861 = vpack.c.b16 %v715, %v713
      %v862 = vpack.c.b16 %v716, %v714
      %v863 = vpack.c.b16 %v719, %v717
      %v864 = vpack.c.b16 %v720, %v718
      %v865 = vpack.c.b16 %v723, %v721
      %v866 = vpack.c.b16 %v724, %v722
      %v867 = vpack.c.b16 %v727, %v725
      %v868 = vpack.c.b16 %v728, %v726
      %v869 = vpack.c.b16 %v731, %v729
      %v870 = vpack.c.b16 %v732, %v730
      %v871 = vpack.c.b16 %v735, %v733
      %v872 = vpack.c.b16 %v736, %v734
      %v873 = vpack.c.b16 %v739, %v737
      %v874 = vpack.c.b16 %v740, %v738
      %v875 = vpack.c.b16 %v743, %v741
      %v876 = vpack.c.b16 %v744, %v742
      %v877 = vpack.c.b16 %v747, %v745
      %v878 = vpack.c.b16 %v748, %v746
      %v879 = vpack.c.b16 %v751, %v749
      %v880 = vpack.c.b16 %v752, %v750
      %1009 = vmatprep.subr.bf16.mxu0 %v768
      %1010 = vmatpush1.bf16.msra.mxu0 %v767
      %1011 = vmatprep.subr.bf16.mxu0 %v766
      %1012 = vmatpush1.bf16.msra.mxu0 %v765
      %1013 = vmatprep.subr.bf16.mxu0 %v764
      %1014 = vmatpush1.bf16.msra.mxu0 %v763
      %1015 = vmatprep.subr.bf16.mxu0 %v762
      %1016 = vmatpush1.bf16.msra.mxu0 %v761
      %1017 = vmatprep.subr.bf16.mxu0 %v760
      %1018 = vmatpush1.bf16.msra.mxu0 %v759
      %1019 = vmatprep.subr.bf16.mxu0 %v758
      %1020 = vmatpush1.bf16.msra.mxu0 %v757
      %1021 = vmatprep.subr.bf16.mxu0 %v756
      %1022 = vmatpush1.bf16.msra.mxu0 %v755
      %1023 = vmatprep.subr.bf16.mxu0 %v754
      %1024 = vmatpush1.bf16.msra.mxu0 %v753
      %1025 = vmatprep.subr.bf16.mxu0 %v784
      %1026 = vmatpush2.bf16.msra.mxu0 %v783
      %1027 = vmatprep.subr.bf16.mxu0 %v782
      %1028 = vmatpush2.bf16.msra.mxu0 %v781
      %1029 = vmatprep.subr.bf16.mxu0 %v780
      %1030 = vmatpush2.bf16.msra.mxu0 %v779
      %1031 = vmatprep.subr.bf16.mxu0 %v778
      %1032 = vmatpush2.bf16.msra.mxu0 %v777
      %1033 = vmatprep.subr.bf16.mxu0 %v776
      %1034 = vmatpush2.bf16.msra.mxu0 %v775
      %1035 = vmatprep.subr.bf16.mxu0 %v774
      %1036 = vmatpush2.bf16.msra.mxu0 %v773
      %1037 = vmatprep.subr.bf16.mxu0 %v772
      %1038 = vmatpush2.bf16.msra.mxu0 %v771
      %1039 = vmatprep.subr.bf16.mxu0 %v770
      %1040 = vmatpush2.bf16.msra.mxu0 %v769
      %1041 = vmatprep.mubr.bf16.mxu0 %v354
      %1042 = vmatmul.mubr.bf16.gmra.mxu0 %v353
      %v1043 = vpop.f32.mrf.mxu0
      %v1044 = vadd.f32 %v334, %v1043
      %v1045 = vpop.f32.mrf.mxu0
      %v1046 = vadd.f32 %v338, %v1045
      %v1047 = vpop.f32.mrf.mxu0
      %v1048 = vpop.f32.mrf.mxu0
      %1049 = vdwg.mxu0
      %1050 = vmatprep.subr.bf16.mxu0 %v800
      %1051 = vmatpush1.bf16.msra.mxu0 %v799
      %1052 = vmatprep.subr.bf16.mxu0 %v798
      %1053 = vmatpush1.bf16.msra.mxu0 %v797
      %1054 = vmatprep.subr.bf16.mxu0 %v796
      %1055 = vmatpush1.bf16.msra.mxu0 %v795
      %1056 = vmatprep.subr.bf16.mxu0 %v794
      %1057 = vmatpush1.bf16.msra.mxu0 %v793
      %1058 = vmatprep.subr.bf16.mxu0 %v792
      %1059 = vmatpush1.bf16.msra.mxu0 %v791
      %1060 = vmatprep.subr.bf16.mxu0 %v790
      %1061 = vmatpush1.bf16.msra.mxu0 %v789
      %1062 = vmatprep.subr.bf16.mxu0 %v788
      %1063 = vmatpush1.bf16.msra.mxu0 %v787
      %1064 = vmatprep.subr.bf16.mxu0 %v786
      %1065 = vmatpush1.bf16.msra.mxu0 %v785
      %1066 = vmatprep.subr.bf16.mxu0 %v816
      %1067 = vmatpush2.bf16.msra.mxu0 %v815
      %1068 = vmatprep.subr.bf16.mxu0 %v814
      %1069 = vmatpush2.bf16.msra.mxu0 %v813
      %1070 = vmatprep.subr.bf16.mxu0 %v812
      %1071 = vmatpush2.bf16.msra.mxu0 %v811
      %1072 = vmatprep.subr.bf16.mxu0 %v810
      %1073 = vmatpush2.bf16.msra.mxu0 %v809
      %1074 = vmatprep.subr.bf16.mxu0 %v808
      %1075 = vmatpush2.bf16.msra.mxu0 %v807
      %1076 = vmatprep.subr.bf16.mxu0 %v806
      %1077 = vmatpush2.bf16.msra.mxu0 %v805
      %1078 = vmatprep.subr.bf16.mxu0 %v804
      %1079 = vmatpush2.bf16.msra.mxu0 %v803
      %1080 = vmatprep.subr.bf16.mxu0 %v802
      %1081 = vmatpush2.bf16.msra.mxu0 %v801
      %1082 = vmatprep.mubr.bf16.mxu0 %v356
      %1083 = vmatmul.mubr.bf16.gmra.mxu0 %v355
      %v1084 = vpop.f32.mrf.mxu0
      %v1085 = vadd.f32 %v1044, %v1084
      %v1086 = vpop.f32.mrf.mxu0
      %v1087 = vadd.f32 %v1046, %v1086
      %v1088 = vpop.f32.mrf.mxu0
      %v1089 = vpop.f32.mrf.mxu0
      %1090 = vdwg.mxu0
      %1091 = vmatprep.subr.bf16.mxu0 %v832
      %1092 = vmatpush1.bf16.msra.mxu0 %v831
      %1093 = vmatprep.subr.bf16.mxu0 %v830
      %1094 = vmatpush1.bf16.msra.mxu0 %v829
      %1095 = vmatprep.subr.bf16.mxu0 %v828
      %1096 = vmatpush1.bf16.msra.mxu0 %v827
      %1097 = vmatprep.subr.bf16.mxu0 %v826
      %1098 = vmatpush1.bf16.msra.mxu0 %v825
      %1099 = vmatprep.subr.bf16.mxu0 %v824
      %1100 = vmatpush1.bf16.msra.mxu0 %v823
      %1101 = vmatprep.subr.bf16.mxu0 %v822
      %1102 = vmatpush1.bf16.msra.mxu0 %v821
      %1103 = vmatprep.subr.bf16.mxu0 %v820
      %1104 = vmatpush1.bf16.msra.mxu0 %v819
      %1105 = vmatprep.subr.bf16.mxu0 %v818
      %1106 = vmatpush1.bf16.msra.mxu0 %v817
      %1107 = vmatprep.subr.bf16.mxu0 %v848
      %1108 = vmatpush2.bf16.msra.mxu0 %v847
      %1109 = vmatprep.subr.bf16.mxu0 %v846
      %1110 = vmatpush2.bf16.msra.mxu0 %v845
      %1111 = vmatprep.subr.bf16.mxu0 %v844
      %1112 = vmatpush2.bf16.msra.mxu0 %v843
      %1113 = vmatprep.subr.bf16.mxu0 %v842
      %1114 = vmatpush2.bf16.msra.mxu0 %v841
      %1115 = vmatprep.subr.bf16.mxu0 %v840
      %1116 = vmatpush2.bf16.msra.mxu0 %v839
      %1117 = vmatprep.subr.bf16.mxu0 %v838
      %1118 = vmatpush2.bf16.msra.mxu0 %v837
      %1119 = vmatprep.subr.bf16.mxu0 %v836
      %1120 = vmatpush2.bf16.msra.mxu0 %v835
      %1121 = vmatprep.subr.bf16.mxu0 %v834
      %1122 = vmatpush2.bf16.msra.mxu0 %v833
      %1123 = vmatprep.mubr.bf16.mxu0 %v358
      %1124 = vmatmul.mubr.bf16.gmra.mxu0 %v357
      %v1125 = vpop.f32.mrf.mxu0
      %v1126 = vadd.f32 %v1085, %v1125
      %v1127 = vpop.f32.mrf.mxu0
      %v1128 = vadd.f32 %v1087, %v1127
      %v1129 = vpop.f32.mrf.mxu0
      %v1130 = vpop.f32.mrf.mxu0
      %1131 = vdwg.mxu0
      %1132 = vmatprep.subr.bf16.mxu0 %v864
      %1133 = vmatpush1.bf16.msra.mxu0 %v863
      %1134 = vmatprep.subr.bf16.mxu0 %v862
      %1135 = vmatpush1.bf16.msra.mxu0 %v861
      %1136 = vmatprep.subr.bf16.mxu0 %v860
      %1137 = vmatpush1.bf16.msra.mxu0 %v859
      %1138 = vmatprep.subr.bf16.mxu0 %v858
      %1139 = vmatpush1.bf16.msra.mxu0 %v857
      %1140 = vmatprep.subr.bf16.mxu0 %v856
      %1141 = vmatpush1.bf16.msra.mxu0 %v855
      %1142 = vmatprep.subr.bf16.mxu0 %v854
      %1143 = vmatpush1.bf16.msra.mxu0 %v853
      %1144 = vmatprep.subr.bf16.mxu0 %v852
      %1145 = vmatpush1.bf16.msra.mxu0 %v851
      %1146 = vmatprep.subr.bf16.mxu0 %v850
      %1147 = vmatpush1.bf16.msra.mxu0 %v849
      %1148 = vmatprep.subr.bf16.mxu0 %v880
      %1149 = vmatpush2.bf16.msra.mxu0 %v879
      %1150 = vmatprep.subr.bf16.mxu0 %v878
      %1151 = vmatpush2.bf16.msra.mxu0 %v877
      %1152 = vmatprep.subr.bf16.mxu0 %v876
      %1153 = vmatpush2.bf16.msra.mxu0 %v875
      %1154 = vmatprep.subr.bf16.mxu0 %v874
      %1155 = vmatpush2.bf16.msra.mxu0 %v873
      %1156 = vmatprep.subr.bf16.mxu0 %v872
      %1157 = vmatpush2.bf16.msra.mxu0 %v871
      %1158 = vmatprep.subr.bf16.mxu0 %v870
      %1159 = vmatpush2.bf16.msra.mxu0 %v869
      %1160 = vmatprep.subr.bf16.mxu0 %v868
      %1161 = vmatpush2.bf16.msra.mxu0 %v867
      %1162 = vmatprep.subr.bf16.mxu0 %v866
      %1163 = vmatpush2.bf16.msra.mxu0 %v865
      %1164 = vmatprep.mubr.bf16.mxu0 %v360
      %1165 = vmatmul.mubr.bf16.gmra.mxu0 %v359
      %v1166 = vpop.f32.mrf.mxu0
      %v1167 = vadd.f32 %v1126, %v1166
      %v1168 = vpop.f32.mrf.mxu0
      %v1169 = vadd.f32 %v1128, %v1168
      %v1170 = vpop.f32.mrf.mxu0
      %v1171 = vpop.f32.mrf.mxu0
      %1172 = vdwg.mxu0
      %v1173 = vmax.f32 %v1167, 0.0
      %v1174 = vmax.f32 %v1169, 0.0
      %v1175 = vpack.c.bf16 %v1173, %v1173
      %v1176 = vpack.c.bf16 %v1174, %v1174
      %v1177 = vld [vmem:[%s2] sm:$0xf]
      %v1178 = vld [vmem:[%s2 + $0x4] sm:$0xf]
      %v1179 = vld [vmem:[%s2 + $0x8] sm:$0xf]
      %v1180 = vld [vmem:[%s2 + $0xc] sm:$0xf]
      %v1181 = vld [vmem:[%s2 + $0x10] sm:$0xf]
      %v1182 = vld [vmem:[%s2 + $0x14] sm:$0xf]
      %v1183 = vld [vmem:[%s2 + $0x18] sm:$0xf]
      %v1184 = vld [vmem:[%s2 + $0x1c] sm:$0xf]
      %v1185 = vld [vmem:[%s2 + $0x20] sm:$0xf]
      %v1186 = vld [vmem:[%s2 + $0x24] sm:$0xf]
      %v1187 = vld [vmem:[%s2 + $0x28] sm:$0xf]
      %v1188 = vld [vmem:[%s2 + $0x2c] sm:$0xf]
      %v1189 = vld [vmem:[%s2 + $0x30] sm:$0xf]
      %v1190 = vld [vmem:[%s2 + $0x34] sm:$0xf]
      %v1191 = vld [vmem:[%s2 + $0x38] sm:$0xf]
      %v1192 = vld [vmem:[%s2 + $0x3c] sm:$0xf]
      %v1193 = vld [vmem:[%s2 + $0x40] sm:$0xf]
      %v1194 = vld [vmem:[%s2 + $0x44] sm:$0xf]
      %v1195 = vld [vmem:[%s2 + $0x48] sm:$0xf]
      %v1196 = vld [vmem:[%s2 + $0x4c] sm:$0xf]
      %v1197 = vld [vmem:[%s2 + $0x50] sm:$0xf]
      %v1198 = vld [vmem:[%s2 + $0x54] sm:$0xf]
      %v1199 = vld [vmem:[%s2 + $0x58] sm:$0xf]
      %v1200 = vld [vmem:[%s2 + $0x5c] sm:$0xf]
      %v1201 = vld [vmem:[%s2 + $0x60] sm:$0xf]
      %v1202 = vld [vmem:[%s2 + $0x64] sm:$0xf]
      %v1203 = vld [vmem:[%s2 + $0x68] sm:$0xf]
      %v1204 = vld [vmem:[%s2 + $0x6c] sm:$0xf]
      %v1205 = vld [vmem:[%s2 + $0x70] sm:$0xf]
      %v1206 = vld [vmem:[%s2 + $0x74] sm:$0xf]
      %v1207 = vld [vmem:[%s2 + $0x78] sm:$0xf]
      %v1208 = vld [vmem:[%s2 + $0x7c] sm:$0xf]
      %v1209 = vld [vmem:[%s3 + $0x1] ss:$0 sm:$0xff]
      %v1242 = vunpack.c.l.b16 %v1177
      %v1243 = vunpack.c.l.b16 %v1178
      %v1244 = vunpack.c.l.b16 %v1179
      %v1245 = vunpack.c.l.b16 %v1180
      %v1246 = vunpack.c.l.b16 %v1181
      %v1247 = vunpack.c.l.b16 %v1182
      %v1248 = vunpack.c.l.b16 %v1183
      %v1249 = vunpack.c.l.b16 %v1184
      %v1250 = vunpack.c.l.b16 %v1185
      %v1251 = vunpack.c.l.b16 %v1186
      %v1252 = vunpack.c.l.b16 %v1187
      %v1253 = vunpack.c.l.b16 %v1188
      %v1254 = vunpack.c.l.b16 %v1189
      %v1255 = vunpack.c.l.b16 %v1190
      %v1256 = vunpack.c.l.b16 %v1191
      %v1257 = vunpack.c.l.b16 %v1192
      %v1258 = vunpack.c.l.b16 %v1193
      %v1259 = vunpack.c.l.b16 %v1194
      %v1260 = vunpack.c.l.b16 %v1195
      %v1261 = vunpack.c.l.b16 %v1196
      %v1262 = vunpack.c.l.b16 %v1197
      %v1263 = vunpack.c.l.b16 %v1198
      %v1264 = vunpack.c.l.b16 %v1199
      %v1265 = vunpack.c.l.b16 %v1200
      %v1266 = vunpack.c.l.b16 %v1201
      %v1267 = vunpack.c.l.b16 %v1202
      %v1268 = vunpack.c.l.b16 %v1203
      %v1269 = vunpack.c.l.b16 %v1204
      %v1270 = vunpack.c.l.b16 %v1205
      %v1271 = vunpack.c.l.b16 %v1206
      %v1272 = vunpack.c.l.b16 %v1207
      %v1273 = vunpack.c.l.b16 %v1208
      %v1274 = vpack.c.b16 %v1243, %v1242
      %v1275 = vpack.c.b16 %v1245, %v1244
      %v1276 = vpack.c.b16 %v1247, %v1246
      %v1277 = vpack.c.b16 %v1249, %v1248
      %v1278 = vpack.c.b16 %v1251, %v1250
      %v1279 = vpack.c.b16 %v1253, %v1252
      %v1280 = vpack.c.b16 %v1255, %v1254
      %v1281 = vpack.c.b16 %v1257, %v1256
      %v1282 = vpack.c.b16 %v1259, %v1258
      %v1283 = vpack.c.b16 %v1261, %v1260
      %v1284 = vpack.c.b16 %v1263, %v1262
      %v1285 = vpack.c.b16 %v1265, %v1264
      %v1286 = vpack.c.b16 %v1267, %v1266
      %v1287 = vpack.c.b16 %v1269, %v1268
      %v1288 = vpack.c.b16 %v1271, %v1270
      %v1289 = vpack.c.b16 %v1273, %v1272
      %1306 = vmatprep.subr.bf16.mxu0 0
      %1307 = vmatpush1.bf16.msra.mxu0 %v1281
      %1308 = vmatprep.subr.bf16.mxu0 0
      %1309 = vmatpush1.bf16.msra.mxu0 %v1280
      %1310 = vmatprep.subr.bf16.mxu0 0
      %1311 = vmatpush1.bf16.msra.mxu0 %v1279
      %1312 = vmatprep.subr.bf16.mxu0 0
      %1313 = vmatpush1.bf16.msra.mxu0 %v1278
      %1314 = vmatprep.subr.bf16.mxu0 0
      %1315 = vmatpush1.bf16.msra.mxu0 %v1277
      %1316 = vmatprep.subr.bf16.mxu0 0
      %1317 = vmatpush1.bf16.msra.mxu0 %v1276
      %1318 = vmatprep.subr.bf16.mxu0 0
      %1319 = vmatpush1.bf16.msra.mxu0 %v1275
      %1320 = vmatprep.subr.bf16.mxu0 0
      %1321 = vmatpush1.bf16.msra.mxu0 %v1274
      %1322 = vmatprep.subr.bf16.mxu0 0
      %1323 = vmatpush2.bf16.msra.mxu0 %v1289
      %1324 = vmatprep.subr.bf16.mxu0 0
      %1325 = vmatpush2.bf16.msra.mxu0 %v1288
      %1326 = vmatprep.subr.bf16.mxu0 0
      %1327 = vmatpush2.bf16.msra.mxu0 %v1287
      %1328 = vmatprep.subr.bf16.mxu0 0
      %1329 = vmatpush2.bf16.msra.mxu0 %v1286
      %1330 = vmatprep.subr.bf16.mxu0 0
      %1331 = vmatpush2.bf16.msra.mxu0 %v1285
      %1332 = vmatprep.subr.bf16.mxu0 0
      %1333 = vmatpush2.bf16.msra.mxu0 %v1284
      %1334 = vmatprep.subr.bf16.mxu0 0
      %1335 = vmatpush2.bf16.msra.mxu0 %v1283
      %1336 = vmatprep.subr.bf16.mxu0 0
      %1337 = vmatpush2.bf16.msra.mxu0 %v1282
      %1338 = vmatprep.mubr.bf16.mxu0 %v1176
      %1339 = vmatmul.mubr.bf16.gmra.mxu0 %v1175
      %v1340 = vpop.f32.mrf.mxu0
      %v1341 = vadd.f32 %v1209, %v1340
      %v1342 = vpop.f32.mrf.mxu0
      %v1343 = vpop.f32.mrf.mxu0
      %v1344 = vpop.f32.mrf.mxu0
      %1345 = vdwg.mxu0
      %v1346 = vrot.slane %v1341, 4
      %v1347 = vadd.f32 %v1341, %v1346
      %v1348 = vrot.slane %v1347, 2
      %v1349 = vadd.f32 %v1347, %v1348
      %v1350 = vrot.slane %v1349, 1
      %v1351 = vadd.f32 %v1349, %v1350
      %v1352 = vrcp.pop 8.0
      %v1353 = vmul.f32 %v1351, %v1352
      %v1354 = vsub.f32 %v1341, %v1353
      %v1355 = vmul.f32 %v1354, %v1354
      %v1356 = vrot.slane %v1355, 4
      %v1357 = vadd.f32 %v1355, %v1356
      %v1358 = vrot.slane %v1357, 2
      %v1359 = vadd.f32 %v1357, %v1358
      %v1360 = vrot.slane %v1359, 1
      %v1361 = vadd.f32 %v1359, %v1360
      %v1362 = vrcp.pop 7.0
      %v1363 = vmul.f32 %v1361, %v1362
      %v1364 = vadd.f32 %v1363, 1e-08
      %v1365 = vrsqrt.pop %v1364
      %v1366 = vld [vmem:[%s3 + $0x2] ss:$0 sm:$0xff]
      %v1367 = vld [vmem:[%s3 + $0x3] ss:$0 sm:$0xff]
      %v1368 = vmul.f32 %v1354, %v1365
      %v1369 = vmul.f32 %v1368, %v1366
      %v1370 = vadd.f32 %v1369, %v1367
      %1371 = vmatprep.subr.mxu0 0.0
      %1372 = vmatpush1.xpose.msra.mxu0 0.0
      %1373 = vmatprep.subr.mxu0 0.0
      %1374 = vmatpush1.xpose.msra.mxu0 0.0
      %1375 = vmatprep.subr.mxu0 0.0
      %1376 = vmatpush1.xpose.msra.mxu0 0.0
      %1377 = vmatprep.subr.mxu0 0.0
      %1378 = vmatpush1.xpose.msra.mxu0 0.0
      %1379 = vmatprep.subr.mxu0 0.0
      %1380 = vmatpush1.xpose.msra.mxu0 0.0
      %1381 = vmatprep.subr.mxu0 0.0
      %1382 = vmatpush1.xpose.msra.mxu0 0.0
      %1383 = vmatprep.subr.mxu0 0.0
      %1384 = vmatpush1.xpose.msra.mxu0 0.0
      %1385 = vmatprep.subr.mxu0 0.0
      %1386 = vmatpush1.xpose.msra.mxu0 0.0
      %1387 = vmatprep.subr.mxu0 0.0
      %1388 = vmatpush1.xpose.msra.mxu0 0.0
      %1389 = vmatprep.subr.mxu0 0.0
      %1390 = vmatpush1.xpose.msra.mxu0 0.0
      %1391 = vmatprep.subr.mxu0 0.0
      %1392 = vmatpush1.xpose.msra.mxu0 0.0
      %1393 = vmatprep.subr.mxu0 0.0
      %1394 = vmatpush1.xpose.msra.mxu0 0.0
      %1395 = vmatprep.subr.mxu0 0.0
      %1396 = vmatpush1.xpose.msra.mxu0 0.0
      %1397 = vmatprep.subr.mxu0 0.0
      %1398 = vmatpush1.xpose.msra.mxu0 0.0
      %1399 = vmatprep.subr.mxu0 0.0
      %1400 = vmatpush1.xpose.msra.mxu0 0.0
      %1401 = vmatprep.subr.mxu0 0.0
      %1402 = vmatpush1.xpose.msra.mxu0 %v1370
      %1403 = vmatprep.subr.mxu0 0.0
      %1404 = vmatpush2.xpose.msra.mxu0 0.0
      %1405 = vmatprep.subr.mxu0 0.0
      %1406 = vmatpush2.xpose.msra.mxu0 0.0
      %1407 = vmatprep.subr.mxu0 0.0
      %1408 = vmatpush2.xpose.msra.mxu0 0.0
      %1409 = vmatprep.subr.mxu0 0.0
      %1410 = vmatpush2.xpose.msra.mxu0 0.0
      %1411 = vmatprep.subr.mxu0 0.0
      %1412 = vmatpush2.xpose.msra.mxu0 0.0
      %1413 = vmatprep.subr.mxu0 0.0
      %1414 = vmatpush2.xpose.msra.mxu0 0.0
      %1415 = vmatprep.subr.mxu0 0.0
      %1416 = vmatpush2.xpose.msra.mxu0 0.0
      %1417 = vmatprep.subr.mxu0 0.0
      %1418 = vmatpush2.xpose.msra.mxu0 0.0
      %1419 = vmatprep.subr.mxu0 0.0
      %1420 = vmatpush2.xpose.msra.mxu0 0.0
      %1421 = vmatprep.subr.mxu0 0.0
      %1422 = vmatpush2.xpose.msra.mxu0 0.0
      %1423 = vmatprep.subr.mxu0 0.0
      %1424 = vmatpush2.xpose.msra.mxu0 0.0
      %1425 = vmatprep.subr.mxu0 0.0
      %1426 = vmatpush2.xpose.msra.mxu0 0.0
      %1427 = vmatprep.subr.mxu0 0.0
      %1428 = vmatpush2.xpose.msra.mxu0 0.0
      %1429 = vmatprep.subr.mxu0 0.0
      %1430 = vmatpush2.xpose.msra.mxu0 0.0
      %1431 = vmatprep.subr.mxu0 0.0
      %1432 = vmatpush2.xpose.msra.mxu0 0.0
      %1433 = vmatprep.subr.mxu0 0.0
      %1434 = vmatpush2.xpose.msra.mxu0 0.0
      %1435 = vmatprep.mubr.f32.mxu0 0.0
      %1436 = vmatmul.mubr.f32.gmra.mxu0 %v1370
      %v1437 = vpop.f32.mrf.mxu0
      %v1438 = vadd.f32 0.0, %v1437
      %v1439 = vpop.f32.mrf.mxu0
      %1440 = vdwg.mxu0
      %v1441 = vlaneseq
      %v1442 = vshrl.u32 %v1441, 7
      %v1443 = vlaneseq
      %v1444 = vand.u32 %v1443, 127
      %vm1445 = vcmp.le.s32.totalorder %v1444, %v1442
      %v1446 = vsel %vm1445, %v1438, -1e+30
      %vm1447 = vcmask 64512
      %v1448 = vsel %vm1447, %v1446, -inf
      %1449 = vmax.xlane.f32.xlu0 %v1448
      %v1450 = vpop.xlane.xlu0 %1449
      %v1451 = vsub.f32 %v1446, %v1450
      %v1452 = vmul.f32 %v1451, 1.442695
      %v1453 = vpow.pop %v1452
      %v1454 = vsel %vm1445, %v1453, 0.0
      %v1455 = vsel %vm1447, %v1454, 0.0
      %1456 = vadd.xlane.f32.xlu0 %v1455
      %v1457 = vpop.xlane.xlu0 %1456
      %v1458 = vrcp.pop %v1457
      %v1459 = vmul.f32 %v1454, %v1458
      %vm1460 = vcmp.eq.s32.totalorder %v1442, %v1444
      %1461 = vxpose.xlu0.b32.start [1/16] %v1459, 128
      %1462 = vxpose.xlu0.b32.cont [2/16] 0.0, 128
      %1463 = vxpose.xlu0.b32.cont [3/16] 0.0, 128
      %1464 = vxpose.xlu0.b32.cont [4/16] 0.0, 128
      %1465 = vxpose.xlu0.b32.cont [5/16] 0.0, 128
      %1466 = vxpose.xlu0.b32.cont [6/16] 0.0, 128
      %1467 = vxpose.xlu0.b32.cont [7/16] 0.0, 128
      %1468 = vxpose.xlu0.b32.cont [8/16] 0.0, 128
      %1469 = vxpose.xlu0.b32.cont [9/16] 0.0, 128
      %1470 = vxpose.xlu0.b32.cont [10/16] 0.0, 128
      %1471 = vxpose.xlu0.b32.cont [11/16] 0.0, 128
      %1472 = vxpose.xlu0.b32.cont [12/16] 0.0, 128
      %1473 = vxpose.xlu0.b32.cont [13/16] 0.0, 128
      %1474 = vxpose.xlu0.b32.cont [14/16] 0.0, 128
      %1475 = vxpose.xlu0.b32.cont [15/16] 0.0, 128
      %1476 = vxpose.xlu0.b32.end [16/16] 0.0, 128
      %v1477 = vpop.trf.xlu0
      %v1478 = vpop.trf.xlu0
      %v1479 = vpop.trf.xlu0
      %v1480 = vpop.trf.xlu0
      %v1481 = vpop.trf.xlu0
      %v1482 = vpop.trf.xlu0
      %v1483 = vpop.trf.xlu0
      %v1484 = vpop.trf.xlu0
      %v1485 = vpop.trf.xlu0
      %v1486 = vpop.trf.xlu0
      %v1487 = vpop.trf.xlu0
      %v1488 = vpop.trf.xlu0
      %v1489 = vpop.trf.xlu0
      %v1490 = vpop.trf.xlu0
      %v1491 = vpop.trf.xlu0
      %v1492 = vpop.trf.xlu0
      %v1493 = vsel %vm1460, 0.0, %v1477
      %v1494 = vadd.f32 %v1459, %v1493
      %v1495 = vsel %vm1447, %v1494, 0.0
      %1496 = vst [vmem:[%s195] sm:$0xff] %v1495
      %p1497 = scmp.lt.s32.totalorder %s15, 1
      %s1498 = scalar_select %p1497, %s15, 1
      %s1499 = smul.addr %s1498, 8
      %s1500 = scalar_lea.vmem %s4, %s1499
      // Predicated region
      $region37: #{corelnet_forward.1} parent=35 // pred_check
        %p1501 = pneg %p122
      $region38: #{corelnet_forward.1} parent=35 // pred_check_branch
        %1503 = sbr.rel (%p1501) target = $region40
      $region39: #{corelnet_forward.1} parent=35 // pred_region
        _
      $region40: #{corelnet_forward.1} parent=35 // pred_fallthru
        _
    $region36: #{corelnet_forward.1} parent=5 // pred_fallthru
      _
    %p1504 = scmp.le.s32.totalorder 2, %s10
    // Predicated region
    $region41: #{corelnet_forward.1} parent=5 // pred_check
      %p1505 = pneg %p1504
    $region42: #{corelnet_forward.1} parent=5 // pred_check_branch
      %1507 = sbr.rel (%p1505) target = $region44
    $region43: #{corelnet_forward.1} parent=5 // pred_region
      %s1508 = ssub.s32 %s10, 2
      // Predicated region
      $region45: #{corelnet_forward.1} parent=43 // pred_check
        %p1509 = pneg %p128
      $region46: #{corelnet_forward.1} parent=43 // pred_check_branch
        %1511 = sbr.rel (%p1509) target = $region48
      $region47: #{corelnet_forward.1} parent=43 // pred_region
        %p1512 = scmp.lt.s32.totalorder %s16, 1
        %s1513 = scalar_select %p1512, %s16, 1
        %s1514 = smul.addr %s1513, 8
        %s1515 = scalar_lea.vmem %s4, %s1514
      $region48: #{corelnet_forward.1} parent=43 // pred_fallthru
        _
    $region44: #{corelnet_forward.1} parent=5 // pred_fallthru
      _
  $region6: #{corelnet_forward.1} parent=0 // loop_footer
    %s14 = sadd.s32 1, %s10
  $region7: #{corelnet_forward.1} parent=0 // loop_footer_branch
    %9 = sbr.rel target = $region3
  $region8: #{corelnet_forward.1} parent=0 // loop_exit
    _

</llo_original>
